<compile_context>
chip_gen: v5e
topology: v5e:2x2
jax: 0.10.0
libtpu: 0.0.40
codegen_flags: <defaults>
</compile_context>

<pallas_src>
import functools

import jax
import jax.numpy as jnp
from jax.experimental import pallas as pl
from jax.experimental.pallas import tpu as pltpu

INPUT_DIM = 6
HIDDEN_DIM = 32
N_BRANCH = 4
FUSION_HIDDEN = 16
LANE = 128                    # 4 * HIDDEN_DIM
TOTAL_COL = 4                 # output lane carrying p_total
HF_COL = 8                    # first lane of the fused fusion-hidden block
OUT_W = 8                     # output slab width (lanes 0..3 parts, 4 total)
_MIN_TILE = 512               # don't split batches smaller than 2*_MIN_TILE


def _round_up(n, m):
    return ((n + m - 1) // m) * m


def _cdiv(a, b):
    return -(-a // b)


def _full_model_kernel(x_ref, w1_ref, wz_ref, bias_ref, out_ref):
    """bias_ref rows: 0 = b1 (all branches), 1 = bz (b2 | bf2@lane4 | b2@Wf1+bf1),
    2 = wf2 row (lanes 8..23), rows 3..7 = zero pad."""
    w_dtype = wz_ref.dtype
    x = x_ref[...]                                               # (tb, 6)

    # Four BranchNet first layers fused: (tb, 6) @ (6, 128), f32 accumulate.
    h = jnp.dot(x, w1_ref[...], preferred_element_type=jnp.float32)
    h = jnp.maximum(h + bias_ref[0:1, :], 0.0)                   # (tb, 128) f32

    # Branch second layers + FusionNet first layer folded into ONE matmul:
    #   z[:, 0:4]  = p_parts
    #   z[:, 4]    = bf2                      (bias only; Wz col 4 == 0)
    #   z[:, 8:24] = p_parts @ Wf1 + bf1      (pre-ReLU fusion hidden)
    z = jnp.dot(h.astype(w_dtype), wz_ref[...],
                preferred_element_type=jnp.float32)
    z = z + bias_ref[1:2, :]                                     # (tb, 128) f32

    # FusionNet second layer (16 -> 1) on VPU + XLU instead of an MXU pass.
    hf = jnp.maximum(z, 0.0)
    total = jnp.sum(hf * bias_ref[2:3, :], axis=-1, keepdims=True)   # (tb, 1)

    # Assemble the 8-lane output: lanes 0..3 parts, lane 4 = bf2 + total.
    col8 = jax.lax.broadcasted_iota(jnp.int32, (1, OUT_W), 1)
    out8 = z[:, :OUT_W] + jnp.where(col8 == TOTAL_COL, total, 0.0)
    out_ref[...] = out8.astype(out_ref.dtype)


def init_params(key, input_dim=INPUT_DIM, hidden_dim=HIDDEN_DIM):
    """Deterministic synthetic parameters (PyTorch-like uniform init)."""
    def linear(key, fan_in, fan_out):
        k1, k2 = jax.random.split(key)
        bound = 1.0 / jnp.sqrt(fan_in)
        w = jax.random.uniform(k1, (fan_in, fan_out), jnp.float32, -bound, bound)
        b = jax.random.uniform(k2, (fan_out,), jnp.float32, -bound, bound)
        return w, b

    keys = jax.random.split(key, N_BRANCH * 2 + 2)
    branch = []
    for i in range(N_BRANCH):
        w1, b1 = linear(keys[2 * i], input_dim, hidden_dim)        # Linear(6, 32)
        w2, b2 = linear(keys[2 * i + 1], hidden_dim, 1)            # Linear(32, 1)
        branch.append((w1, b1, w2, b2))
    wf1, bf1 = linear(keys[-2], N_BRANCH, FUSION_HIDDEN)           # Linear(4, 16)
    wf2, bf2 = linear(keys[-1], FUSION_HIDDEN, 1)                  # Linear(16, 1)
    return branch, (wf1, bf1, wf2, bf2)


def pack_params(branch, fusion, compute_dtype=jnp.float32):
    """Fold/pad weights into 3 lane-dense operands.

    Returns (w1 (6,128), wz (128,128)) in `compute_dtype` (MXU operands) and a
    (8,128) float32 bias/VPU slab.
    """
    # First layers: concat along output dim.
    w1_all = jnp.concatenate([b[0] for b in branch], axis=1)           # (6, 128)
    b1_all = jnp.concatenate([b[1] for b in branch], axis=0)           # (128,)

    # Second layers: block-diagonal (128, 4).
    w2_block = jnp.zeros((N_BRANCH * HIDDEN_DIM, N_BRANCH), jnp.float32)
    for i, b in enumerate(branch):
        w2_block = w2_block.at[i * HIDDEN_DIM:(i + 1) * HIDDEN_DIM, i].set(b[2][:, 0])
    b2 = jnp.concatenate([b[3] for b in branch], axis=0)               # (4,)

    wf1, bf1, wf2, bf2 = fusion
    w_fold = w2_block @ wf1                                            # (128, 16)
    b_fold = b2 @ wf1 + bf1                                            # (16,)

    wz = jnp.zeros((LANE, LANE), jnp.float32)
    wz = wz.at[:, :N_BRANCH].set(w2_block)                             # parts lanes 0..3
    wz = wz.at[:, HF_COL:HF_COL + FUSION_HIDDEN].set(w_fold)           # hf lanes 8..23

    bz = jnp.zeros((LANE,), jnp.float32)
    bz = bz.at[:N_BRANCH].set(b2)
    bz = bz.at[TOTAL_COL].set(bf2[0])                                  # bf2 injected at lane 4
    bz = bz.at[HF_COL:HF_COL + FUSION_HIDDEN].set(b_fold)

    wf2_row = jnp.zeros((LANE,), jnp.float32)
    wf2_row = wf2_row.at[HF_COL:HF_COL + FUSION_HIDDEN].set(wf2[:, 0])

    bias = jnp.zeros((8, LANE), jnp.float32)
    bias = bias.at[0].set(b1_all).at[1].set(bz).at[2].set(wf2_row)

    return (w1_all.astype(compute_dtype), wz.astype(compute_dtype), bias)


@functools.partial(jax.jit, static_argnames=("batch_tile",))
def full_model_forward(x, packed, batch_tile=4096):
    w1, wz, bias = packed
    B, D = x.shape
    x = x.astype(w1.dtype)

    # Balanced tiles; guarantee >= 2 grid steps for big batches so the
    # "parallel" batch axis shards across both v7x TensorCores.
    n_steps = max(1, _cdiv(B, batch_tile))
    if n_steps == 1 and B >= 2 * _MIN_TILE:
        n_steps = 2
    tb = _round_up(_cdiv(B, n_steps), 8)
    Bp = n_steps * tb
    if Bp != B:
        x = jnp.pad(x, ((0, Bp - B), (0, 0)))

    full = lambda i: (0, 0)   # constant weights, replicated across batch tiles

    out = pl.pallas_call(
        _full_model_kernel,
        out_shape=jax.ShapeDtypeStruct((Bp, OUT_W), jnp.float32),
        grid_spec=pltpu.PrefetchScalarGridSpec(
            num_scalar_prefetch=0,
            grid=(n_steps,),
            in_specs=[
                pl.BlockSpec((tb, D), lambda i: (i, 0)),       # x
                pl.BlockSpec((D, LANE), full),                 # fused first layers
                pl.BlockSpec((LANE, LANE), full),              # folded W2|W2@Wf1 slab
                pl.BlockSpec((8, LANE), full),                 # bias / wf2 slab (f32)
            ],
            out_specs=pl.BlockSpec((tb, OUT_W), lambda i: (i, 0)),
        ),
        compiler_params=pltpu.CompilerParams(
            dimension_semantics=("parallel",),
            vmem_limit_bytes=32 * 1024 * 1024,
        ),
    )(x, w1, wz, bias)

    p_parts = out[:B, :N_BRANCH]                    # (B, 4)
    p_total = out[:B, TOTAL_COL:TOTAL_COL + 1]      # (B, 1)
    return p_parts, p_total


def reference_forward(x, branch, fusion):
    """Pure-JAX reference replicating the PyTorch module semantics."""
    parts = []
    for (w1, b1, w2, b2) in branch:
        h = jnp.maximum(x @ w1 + b1, 0.0)
        parts.append(h @ w2 + b2)
    p_parts = jnp.concatenate(parts, axis=1)        # (B, 4)
    wf1, bf1, wf2, bf2 = fusion
    hf = jnp.maximum(p_parts @ wf1 + bf1, 0.0)
    p_total = hf @ wf2 + bf2                        # (B, 1)
    return p_parts, p_total


if __name__ == "__main__":
    key = jax.random.PRNGKey(0)
    k_params, k_x = jax.random.split(key)

    branch, fusion = init_params(k_params)

    B = 16  # small test batch; arbitrary B supported (wrapper pads / balances)
    x = jax.random.normal(k_x, (B, INPUT_DIM), jnp.float32)
    ref_parts, ref_total = reference_forward(x, branch, fusion)

    # --- exact float32 path ---
    packed_f32 = pack_params(branch, fusion, jnp.float32)
    p_parts, p_total = full_model_forward(x, packed_f32)
    jax.block_until_ready((p_parts, p_total))
    assert p_parts.shape == (B, N_BRANCH) and p_total.shape == (B, 1)
    assert jnp.allclose(p_parts, ref_parts, atol=1e-5, rtol=1e-5)
    assert jnp.allclose(p_total, ref_total, atol=1e-5, rtol=1e-5)

    # --- bf16 MXU-operand path (f32 accumulation), loosened tolerance ---
    packed_bf16 = pack_params(branch, fusion, jnp.bfloat16)
    p_parts16, p_total16 = full_model_forward(x, packed_bf16)
    jax.block_until_ready((p_parts16, p_total16))
    assert jnp.allclose(p_parts16, ref_parts, atol=5e-2, rtol=5e-2)
    assert jnp.allclose(p_total16, ref_total, atol=5e-2, rtol=5e-2)

    print("KERNEL_OK")
</pallas_src>

<mosaic_0001>
module attributes {stable_mosaic.version = 11 : i64} {
  func.func @_full_model_kernel(%arg0: i32, %arg1: memref<16x6xf32, #tpu.memory_space<vmem>>, %arg2: memref<6x128xf32, #tpu.memory_space<vmem>>, %arg3: memref<128x128xf32, #tpu.memory_space<vmem>>, %arg4: memref<8x128xf32, #tpu.memory_space<vmem>>, %arg5: memref<16x8xf32, #tpu.memory_space<vmem>>) attributes {dimension_semantics = [#tpu.dimension_semantics<parallel>], iteration_bounds = array<i64: 1>, scalar_prefetch = 0 : i64, scratch_operands = 0 : i64, tpu.core_type = #tpu.core_type<tc>, window_params = [{transform_indices = @transform_0, window_bounds = array<i64: 16, 6>}, {pipeline_mode = #tpu.pipeline_mode<synchronous>, transform_indices = @transform_1, window_bounds = array<i64: 6, 128>}, {pipeline_mode = #tpu.pipeline_mode<synchronous>, transform_indices = @transform_2, window_bounds = array<i64: 128, 128>}, {pipeline_mode = #tpu.pipeline_mode<synchronous>, transform_indices = @transform_3, window_bounds = array<i64: 8, 128>}, {transform_indices = @transform_4, window_bounds = array<i64: 16, 8>}]} {
    %c0 = arith.constant 0 : index
    %c0_0 = arith.constant 0 : index
    %0 = vector.load %arg1[%c0, %c0_0] : memref<16x6xf32, #tpu.memory_space<vmem>>, vector<16x6xf32>
    %c0_1 = arith.constant 0 : index
    %c0_2 = arith.constant 0 : index
    %1 = vector.load %arg2[%c0_1, %c0_2] : memref<6x128xf32, #tpu.memory_space<vmem>>, vector<6x128xf32>
    %cst = arith.constant dense<0.000000e+00> : vector<16x128xf32>
    %2 = tpu.matmul %0, %1, %cst {dimension_numbers = #tpu.dot_dimension_numbers<[1], [0], [0], [1], [0, 0, 1, 1], [], []>} : vector<16x6xf32>, vector<6x128xf32>, vector<16x128xf32> -> vector<16x128xf32>
    %c0_3 = arith.constant 0 : index
    %c0_4 = arith.constant 0 : index
    %3 = vector.load %arg4[%c0_3, %c0_4] : memref<8x128xf32, #tpu.memory_space<vmem>>, vector<1x128xf32>
    %4 = vector.broadcast %3 : vector<1x128xf32> to vector<16x128xf32>
    %5 = arith.addf %2, %4 : vector<16x128xf32>
    %cst_5 = arith.constant 0.000000e+00 : f32
    %6 = vector.broadcast %cst_5 : f32 to vector<16x128xf32>
    %7 = arith.maximumf %5, %6 : vector<16x128xf32>
    %c0_6 = arith.constant 0 : index
    %c0_7 = arith.constant 0 : index
    %8 = vector.load %arg3[%c0_6, %c0_7] : memref<128x128xf32, #tpu.memory_space<vmem>>, vector<128x128xf32>
    %cst_8 = arith.constant dense<0.000000e+00> : vector<16x128xf32>
    %9 = tpu.matmul %7, %8, %cst_8 {dimension_numbers = #tpu.dot_dimension_numbers<[1], [0], [0], [1], [0, 0, 1, 1], [], []>} : vector<16x128xf32>, vector<128x128xf32>, vector<16x128xf32> -> vector<16x128xf32>
    %c1 = arith.constant 1 : index
    %c0_9 = arith.constant 0 : index
    %10 = vector.load %arg4[%c1, %c0_9] : memref<8x128xf32, #tpu.memory_space<vmem>>, vector<1x128xf32>
    %11 = vector.broadcast %10 : vector<1x128xf32> to vector<16x128xf32>
    %12 = arith.addf %9, %11 : vector<16x128xf32>
    %cst_10 = arith.constant 0.000000e+00 : f32
    %13 = vector.broadcast %cst_10 : f32 to vector<16x128xf32>
    %14 = arith.maximumf %12, %13 : vector<16x128xf32>
    %c2 = arith.constant 2 : index
    %c0_11 = arith.constant 0 : index
    %15 = vector.load %arg4[%c2, %c0_11] : memref<8x128xf32, #tpu.memory_space<vmem>>, vector<1x128xf32>
    %16 = vector.broadcast %15 : vector<1x128xf32> to vector<16x128xf32>
    %17 = arith.mulf %14, %16 : vector<16x128xf32>
    %cst_12 = arith.constant dense<0.000000e+00> : vector<16xf32>
    %18 = vector.multi_reduction <add>, %17, %cst_12 [1] : vector<16x128xf32> to vector<16xf32>
    %19 = vector.shape_cast %18 : vector<16xf32> to vector<16x1xf32>
    %20 = tpu.iota {dimensions = array<i32: 1>} : vector<1x8xi32>
    %21 = vector.extract_strided_slice %12 {offsets = [0, 0], sizes = [16, 8], strides = [1, 1]} : vector<16x128xf32> to vector<16x8xf32>
    %c4_i32 = arith.constant 4 : i32
    %22 = vector.broadcast %c4_i32 : i32 to vector<1x8xi32>
    %23 = arith.cmpi eq, %20, %22 : vector<1x8xi32>
    %cst_13 = arith.constant 0.000000e+00 : f32
    %24 = vector.shape_cast %23 : vector<1x8xi1> to vector<1x8xi1>
    %25 = vector.broadcast %24 : vector<1x8xi1> to vector<16x8xi1>
    %26 = vector.shape_cast %19 : vector<16x1xf32> to vector<16x1xf32>
    %27 = vector.broadcast %26 : vector<16x1xf32> to vector<16x8xf32>
    %28 = vector.broadcast %cst_13 : f32 to vector<16x8xf32>
    %29 = arith.select %25, %27, %28 : vector<16x8xi1>, vector<16x8xf32>
    %30 = arith.addf %21, %29 : vector<16x8xf32>
    %c0_14 = arith.constant 0 : index
    %c0_15 = arith.constant 0 : index
    %31 = vector.load %arg5[%c0_14, %c0_15] : memref<16x8xf32, #tpu.memory_space<vmem>>, vector<16x8xf32>
    tpu.vector_store %arg5[%c0_14, %c0_15], %30 {strides = array<i32>} : memref<16x8xf32, #tpu.memory_space<vmem>>, vector<16x8xf32>,
    return
  }
  func.func @transform_0(%arg0: i32) -> (i32, i32) {
    %c0_i32 = arith.constant 0 : i32
    %c0_i32_0 = arith.constant 0 : i32
    return %arg0, %c0_i32 : i32, i32
  }
  func.func @transform_1(%arg0: i32) -> (i32, i32) {
    %c0_i32 = arith.constant 0 : i32
    %c0_i32_0 = arith.constant 0 : i32
    %c0_i32_1 = arith.constant 0 : i32
    return %c0_i32, %c0_i32_0 : i32, i32
  }
  func.func @transform_2(%arg0: i32) -> (i32, i32) {
    %c0_i32 = arith.constant 0 : i32
    %c0_i32_0 = arith.constant 0 : i32
    %c0_i32_1 = arith.constant 0 : i32
    return %c0_i32, %c0_i32_0 : i32, i32
  }
  func.func @transform_3(%arg0: i32) -> (i32, i32) {
    %c0_i32 = arith.constant 0 : i32
    %c0_i32_0 = arith.constant 0 : i32
    %c0_i32_1 = arith.constant 0 : i32
    return %c0_i32, %c0_i32_0 : i32, i32
  }
  func.func @transform_4(%arg0: i32) -> (i32, i32) {
    %c0_i32 = arith.constant 0 : i32
    %c0_i32_0 = arith.constant 0 : i32
    return %arg0, %c0_i32 : i32, i32
  }
}

</mosaic_0001>

<llo_original>
// kernel: full_model_forward.1
$region0: #{full_model_forward.1}
  #allocation0 [shape = 'u32[]', space=smem, size = 0x4, offset = 0x4, fixed_abs, tag = 'smem constant byte address 0x4 - core index']
  #allocation1 [shape = 'u32[72,128]{1,0:T(1,128)}', space=vmem, size = 0x9000, scoped, tag = 'internal scratch']
  %s0 = inlined_call_operand.vmem [shape: f32[16,6], index: 0, kind: input, shape index: {}]
  %s1 = inlined_call_operand.vmem [shape: f32[6,128], index: 1, kind: input, shape index: {}]
  %s2 = inlined_call_operand.hbm [shape: f32[128,128], index: 2, kind: input, shape index: {}]
  %s3 = inlined_call_operand.vmem [shape: f32[8,128], index: 3, kind: input, shape index: {}]
  %s4 = inlined_call_operand.vmem [shape: f32[16,8], index: 4, kind: output, shape index: {}]
  %s5 = sld [smem:[#allocation0]]
  $region30: #{full_model_forward.1} parent=0
    _
  %s7 = ssub.s32 1, %s5
  %s8 = scalar_select 0, %s7, %s5
  $region1: #{full_model_forward.1} parent=0
    #allocation2 [shape = 'u8[65536]{0}', space=vmem, size = 0x10000, scoped, tag = 'input window, operand 2, single buffered']
    #allocation3 [shape = 's32[1]{0}', space=sflag, size = 0x4, scoped, tag = 'scoped memory for full_model_forward.1']
    %9 = vsyncpa [#allocation3], 0
    // Predicated region
    $region2: #{full_model_forward.1} parent=1 // pred_check
      _
    $region3: #{full_model_forward.1} parent=1 // pred_check_branch
      %11 = sbr.rel (0) target = $region5
    $region4: #{full_model_forward.1} parent=1 // pred_region
      _
    $region5: #{full_model_forward.1} parent=1 // pred_fallthru
      _
    // Predicated region
    $region6: #{full_model_forward.1} parent=1 // pred_check
      _
    $region7: #{full_model_forward.1} parent=1 // pred_check_branch
      %13 = sbr.rel (0) target = $region9
    $region8: #{full_model_forward.1} parent=1 // pred_region
      _
    $region9: #{full_model_forward.1} parent=1 // pred_fallthru
      _
    // Predicated region
    $region10: #{full_model_forward.1} parent=1 // pred_check
      _
    $region11: #{full_model_forward.1} parent=1 // pred_check_branch
      %15 = sbr.rel (0) target = $region13
    $region12: #{full_model_forward.1} parent=1 // pred_region
      %17 = vsyncadd [#allocation3], 0
      %s18 = sshll.u32 %s2, 4
      %s19 = int_to_ptr.hbm [resolvable:$true] %s18
      %s20 = sshll.u32 [#allocation2], 4
      %s21 = int_to_ptr.vmem [resolvable:$true] %s20
      %26 = dma.hbm_to_vmem [thread:$0]  %s19, 2048, %s21, [#allocation3], 128, 128, 8
    $region13: #{full_model_forward.1} parent=1 // pred_fallthru
      _
    // Predicated region
    $region14: #{full_model_forward.1} parent=1 // pred_check
      _
    $region15: #{full_model_forward.1} parent=1 // pred_check_branch
      %28 = sbr.rel (0) target = $region17
    $region16: #{full_model_forward.1} parent=1 // pred_region
      _
    $region17: #{full_model_forward.1} parent=1 // pred_fallthru
      _
    // Predicated region
    $region18: #{full_model_forward.1} parent=1 // pred_check
      _
    $region19: #{full_model_forward.1} parent=1 // pred_check_branch
      %30 = sbr.rel (0) target = $region21
    $region20: #{full_model_forward.1} parent=1 // pred_region
      %32 = dma.done [#allocation3], 2048
    $region21: #{full_model_forward.1} parent=1 // pred_fallthru
      _
    %v33 = vld [vmem:[%s0] sm:$0xff]
    %v34 = vld [vmem:[%s0 + $0x8] sm:$0xff]
    %v35 = vld [vmem:[%s1] sm:$0x3f]
    %v36 = vld [vmem:[%s3] sm:$0x1]
    %v37 = vperm.slane %v36, 0
    %vm38 = vcmask 48128
    %v40 = vsel %vm38, %v33, 0
    %v43 = vsel %vm38, %v34, 0
    %vm45 = vcmask 1045504
    %v47 = vsel %vm45, %v35, 0
    %49 = vmatpush.msra.mxu0 0.0
    %50 = vmatpush.msra.mxu0 0.0
    %51 = vmatpush.msra.mxu0 0.0
    %52 = vmatpush.msra.mxu0 0.0
    %53 = vmatpush.msra.mxu0 0.0
    %54 = vmatpush.msra.mxu0 0.0
    %55 = vmatpush.msra.mxu0 0.0
    %56 = vmatpush.msra.mxu0 0.0
    %57 = vmatpush.msra.mxu0 0.0
    %58 = vmatpush.msra.mxu0 0.0
    %59 = vmatpush.msra.mxu0 0.0
    %60 = vmatpush.msra.mxu0 0.0
    %61 = vmatpush.msra.mxu0 0.0
    %62 = vmatpush.msra.mxu0 0.0
    %63 = vmatpush.msra.mxu0 0.0
    %64 = vmatpush.msra.mxu0 %v47
    %65 = vmatmul.f32.gmra.mxu0 %v40
    %v66 = vpop.f32.mrf.mxu0
    %v67 = vadd.f32 %v37, %v66
    %68 = vmatmul.f32.gmra.mxu0 %v43
    %v69 = vpop.f32.mrf.mxu0
    %v70 = vadd.f32 %v37, %v69
    %71 = vdwg.mxu0
    %v72 = vmax.f32 %v67, 0.0
    %v73 = vmax.f32 %v70, 0.0
    %v74 = vld [vmem:[#allocation2] sm:$0xff]
    %v75 = vld [vmem:[#allocation2 + $0x8] sm:$0xff]
    %v76 = vld [vmem:[#allocation2 + $0x10] sm:$0xff]
    %v77 = vld [vmem:[#allocation2 + $0x18] sm:$0xff]
    %v78 = vld [vmem:[#allocation2 + $0x20] sm:$0xff]
    %v79 = vld [vmem:[#allocation2 + $0x28] sm:$0xff]
    %v80 = vld [vmem:[#allocation2 + $0x30] sm:$0xff]
    %v81 = vld [vmem:[#allocation2 + $0x38] sm:$0xff]
    %v82 = vld [vmem:[#allocation2 + $0x40] sm:$0xff]
    %v83 = vld [vmem:[#allocation2 + $0x48] sm:$0xff]
    %v84 = vld [vmem:[#allocation2 + $0x50] sm:$0xff]
    %v85 = vld [vmem:[#allocation2 + $0x58] sm:$0xff]
    %v86 = vld [vmem:[#allocation2 + $0x60] sm:$0xff]
    %v87 = vld [vmem:[#allocation2 + $0x68] sm:$0xff]
    %v88 = vld [vmem:[#allocation2 + $0x70] sm:$0xff]
    %v89 = vld [vmem:[#allocation2 + $0x78] sm:$0xff]
    %v90 = vld [vmem:[%s3 + $0x1] sm:$0x1]
    %v91 = vperm.slane %v90, 0
    %92 = vmatpush.msra.mxu0 %v89
    %93 = vmatpush.msra.mxu0 %v88
    %94 = vmatpush.msra.mxu0 %v87
    %95 = vmatpush.msra.mxu0 %v86
    %96 = vmatpush.msra.mxu0 %v85
    %97 = vmatpush.msra.mxu0 %v84
    %98 = vmatpush.msra.mxu0 %v83
    %99 = vmatpush.msra.mxu0 %v82
    %100 = vmatpush.msra.mxu0 %v81
    %101 = vmatpush.msra.mxu0 %v80
    %102 = vmatpush.msra.mxu0 %v79
    %103 = vmatpush.msra.mxu0 %v78
    %104 = vmatpush.msra.mxu0 %v77
    %105 = vmatpush.msra.mxu0 %v76
    %106 = vmatpush.msra.mxu0 %v75
    %107 = vmatpush.msra.mxu0 %v74
    %108 = vmatmul.f32.gmra.mxu0 %v72
    %v109 = vpop.f32.mrf.mxu0
    %v110 = vadd.f32 %v91, %v109
    %111 = vmatmul.f32.gmra.mxu0 %v73
    %v112 = vpop.f32.mrf.mxu0
    %v113 = vadd.f32 %v91, %v112
    %114 = vdwg.mxu0
    %v115 = vmax.f32 %v110, 0.0
    %v116 = vmax.f32 %v113, 0.0
    %v117 = vld [vmem:[%s3 + $0x2] sm:$0x1]
    %v118 = vperm.slane %v117, 0
    %v119 = vmul.f32 %v115, %v118
    %v120 = vmul.f32 %v116, %v118
    %121 = vadd.xlane.f32.xlu0 %v119
    %v122 = vpop.xlane.xlu0 %121
    %123 = vadd.xlane.f32.xlu0 %v120
    %v124 = vpop.xlane.xlu0 %123
    %v125 = vlaneseq
    %v126 = vand.u32 %v125, 127
    %vm127 = vcmp.eq.s32.totalorder %v126, 4
    %v128 = vsel %vm127, 1, 0
    %vm129 = vcmp.eq.s32.totalorder %v128, 1
    %v130 = vsel %vm129, %v122, 0.0
    %v131 = vsel %vm129, %v124, 0.0
    %v132 = vadd.f32 %v110, %v130
    %v133 = vadd.f32 %v113, %v131
    %vm134 = vcmask 64512
    %135 = vst.msk [vmem:[%s4] sm:$0xff] %vm134, %v132
    %136 = vst.msk [vmem:[%s4 + $0x8] sm:$0xff] %vm134, %v133
    // Predicated region
    $region22: #{full_model_forward.1} parent=1 // pred_check
      _
    $region23: #{full_model_forward.1} parent=1 // pred_check_branch
      %138 = sbr.rel (0) target = $region25
    $region24: #{full_model_forward.1} parent=1 // pred_region
      _
    $region25: #{full_model_forward.1} parent=1 // pred_fallthru
      _
    // Predicated region
    $region26: #{full_model_forward.1} parent=1 // pred_check
      _
    $region27: #{full_model_forward.1} parent=1 // pred_check_branch
      %140 = sbr.rel (0) target = $region29
    $region28: #{full_model_forward.1} parent=1 // pred_region
      _
    $region29: #{full_model_forward.1} parent=1 // pred_fallthru
      _
    %141 = vsyncpa [#allocation3], 1

</llo_original>
